<compile_context>
chip_gen: v5e
topology: v5e:2x2
jax: 0.10.0
libtpu: 0.0.40
codegen_flags: <defaults>
</compile_context>

<pallas_src>
import functools

import jax
import jax.numpy as jnp
from jax.experimental import pallas as pl
from jax.experimental.pallas import tpu as pltpu

_LANES = 128      # lane width (fast axis)
_TM_MAX = 4096    # max sublanes per block: 4096*128*4B = 2 MiB per f32 block
_NCORES = 2       # leading "parallel" grid axis (v7x has 2 TCs; no-op elsewhere)


def _dice_kernel(n_valid, o_ref, t_ref, out_ref, acc_ref):
    """Accumulate [sum(o*t), sum(o+t)] into a (2, 8, 128) VMEM accumulator."""
    c = pl.program_id(0)            # core-split axis (parallel)
    i = pl.program_id(1)            # streaming / reduction axis (arbitrary)
    nsteps = pl.num_programs(1)

    @pl.when(i == 0)
    def _init():
        acc_ref[...] = jnp.zeros_like(acc_ref)

    o = o_ref[...].astype(jnp.float32)
    t = t_ref[...].astype(jnp.float32)
    tm = o.shape[0]
    blk_elems = tm * _LANES

    # Logical global block id.  The index_map clamps the *physical* block so
    # DMAs stay in bounds, but masking is driven by this logical position, so
    # clamped / partial / padded blocks contribute exactly zero.
    gblk = c * nsteps + i
    # n_valid is a Python int baked in at trace time (int32 math: fine for
    # inputs below ~2^31 elements).
    needs_mask = (gblk + 1) * blk_elems > n_valid

    def _accum(ov, tv):
        # Fold (tm, 128) -> (8, 128) with pure vector adds; the reshape only
        # splits the sublane dim, so it is layout-free.
        acc_ref[0] += jnp.sum((ov * tv).reshape(-1, 8, _LANES), axis=0)
        acc_ref[1] += jnp.sum((ov + tv).reshape(-1, 8, _LANES), axis=0)

    @pl.when(needs_mask)
    def _tail():
        base = gblk * blk_elems
        row = jax.lax.broadcasted_iota(jnp.int32, (tm, _LANES), 0)
        col = jax.lax.broadcasted_iota(jnp.int32, (tm, _LANES), 1)
        valid = (base + row * _LANES + col) < n_valid
        _accum(jnp.where(valid, o, 0.0), jnp.where(valid, t, 0.0))

    @pl.when(jnp.logical_not(needs_mask))
    def _body():
        _accum(o, t)

    @pl.when(i == nsteps - 1)
    def _finalize():
        out_ref[0] = acc_ref[...]


def dice_pallas(output: jax.Array, target: jax.Array) -> jax.Array:
    """Equivalent of DICE.forward(output, target); returns a scalar f32."""
    # torch.squeeze only drops size-1 dims; the global sums are unaffected, so
    # a flat view is semantically identical.  Keep the original dtypes in HBM
    # (the cast happens in-kernel); only bool is promoted on the host.
    o = output.reshape(-1)
    t = target.reshape(-1)
    if o.dtype == jnp.bool_:
        o = o.astype(jnp.float32)
    if t.dtype == jnp.bool_:
        t = t.astype(jnp.float32)
    n = o.shape[0]

    # Pad only when the flat length is not a multiple of one (8, 128) tile;
    # everything else ragged is handled by the in-kernel mask.
    tile = 8 * _LANES
    if n % tile != 0:
        pad = tile - n % tile
        o = jnp.pad(o, (0, pad))
        t = jnp.pad(t, (0, pad))
    rows = o.shape[0] // _LANES

    tm = min(_TM_MAX, rows)                              # multiple of 8 by construction
    total_blocks = (rows + tm - 1) // tm
    steps = (total_blocks + _NCORES - 1) // _NCORES      # steps per core

    def in_map(c, i):
        # Clamp so the (at most one) fully out-of-range block of the 2-way
        # split re-reads the last block; its contribution is masked to zero.
        return (jnp.minimum(c * steps + i, total_blocks - 1), 0)

    partials = pl.pallas_call(
        functools.partial(_dice_kernel, n),
        out_shape=jax.ShapeDtypeStruct((_NCORES, 2, 8, _LANES), jnp.float32),
        grid_spec=pltpu.PrefetchScalarGridSpec(
            num_scalar_prefetch=0,
            grid=(_NCORES, steps),
            in_specs=[
                pl.BlockSpec((tm, _LANES), in_map),
                pl.BlockSpec((tm, _LANES), in_map),
            ],
            out_specs=pl.BlockSpec((1, 2, 8, _LANES), lambda c, i: (c, 0, 0, 0)),
            scratch_shapes=[pltpu.VMEM((2, 8, _LANES), jnp.float32)],
        ),
        compiler_params=pltpu.CompilerParams(
            dimension_semantics=("parallel", "arbitrary"),
        ),
    )(o.reshape(rows, _LANES), t.reshape(rows, _LANES))

    sums = jnp.sum(partials, axis=(0, 2, 3))   # [sum(o*t), sum(o) + sum(t)]
    return 2.0 * sums[0] / (sums[1] + jnp.float32(1e-06))


def dice_reference(output: jax.Array, target: jax.Array) -> jax.Array:
    eps = 1e-06
    o = jnp.squeeze(output).astype(jnp.float32)
    t = jnp.squeeze(target).astype(jnp.float32)
    inter = jnp.sum(o * t)
    return 2.0 * inter / (jnp.sum(o) + jnp.sum(t) + eps)


if __name__ == "__main__":
    key = jax.random.PRNGKey(0)
    k1, k2 = jax.random.split(key)

    # Typical segmentation shapes: NCHW with a single channel.
    output = jax.nn.sigmoid(jax.random.normal(k1, (2, 1, 16, 16), jnp.float32))
    target = (jax.random.uniform(k2, (2, 1, 16, 16)) > 0.5).astype(jnp.float32)

    got = jax.block_until_ready(dice_pallas(output, target))
    want = jax.block_until_ready(dice_reference(output, target))

    assert jnp.allclose(got, want, rtol=1e-5, atol=1e-6), (got, want)
    print("KERNEL_OK")
</pallas_src>

<mosaic_0001>
module attributes {stable_mosaic.version = 11 : i64} {
  func.func @_dice_kernel(%arg0: i32, %arg1: i32, %arg2: memref<8x128xf32, #tpu.memory_space<vmem>>, %arg3: memref<8x128xf32, #tpu.memory_space<vmem>>, %arg4: memref<1x2x8x128xf32, #tpu.memory_space<vmem>>, %arg5: memref<2x8x128xf32, #tpu.memory_space<vmem>>) attributes {dimension_semantics = [#tpu.dimension_semantics<parallel>, #tpu.dimension_semantics<arbitrary>], iteration_bounds = array<i64: 2, 1>, scalar_prefetch = 0 : i64, scratch_operands = 1 : i64, tpu.core_type = #tpu.core_type<tc>, window_params = [{transform_indices = @transform_0, window_bounds = array<i64: 8, 128>}, {transform_indices = @transform_1, window_bounds = array<i64: 8, 128>}, {transform_indices = @transform_2, window_bounds = array<i64: 1, 2, 8, 128>}]} {
    %c0_i32 = arith.constant 0 : i32
    %0 = arith.cmpi eq, %arg1, %c0_i32 : i32
    %1 = arith.extui %0 : i1 to i32
    %c0_i32_0 = arith.constant 0 : i32
    %2 = arith.cmpi ne, %1, %c0_i32_0 : i32
    scf.if %2 {
      %cst = arith.constant 0.000000e+00 : f32
      %18 = vector.broadcast %cst : f32 to vector<2x8x128xf32>
      %c0_9 = arith.constant 0 : index
      %c0_10 = arith.constant 0 : index
      %c0_11 = arith.constant 0 : index
      %19 = vector.load %arg5[%c0_9, %c0_10, %c0_11] : memref<2x8x128xf32, #tpu.memory_space<vmem>>, vector<2x8x128xf32>
      tpu.vector_store %arg5[%c0_9, %c0_10, %c0_11], %18 {strides = array<i32>} : memref<2x8x128xf32, #tpu.memory_space<vmem>>, vector<2x8x128xf32>,
    } else {
    }
    %c0 = arith.constant 0 : index
    %c0_1 = arith.constant 0 : index
    %3 = vector.load %arg2[%c0, %c0_1] : memref<8x128xf32, #tpu.memory_space<vmem>>, vector<8x128xf32>
    %c0_2 = arith.constant 0 : index
    %c0_3 = arith.constant 0 : index
    %4 = vector.load %arg3[%c0_2, %c0_3] : memref<8x128xf32, #tpu.memory_space<vmem>>, vector<8x128xf32>
    %c1_i32 = arith.constant 1 : i32
    %5 = arith.muli %arg0, %c1_i32 : i32
    %6 = arith.addi %5, %arg1 : i32
    %c1_i32_4 = arith.constant 1 : i32
    %7 = arith.addi %6, %c1_i32_4 : i32
    %c1024_i32 = arith.constant 1024 : i32
    %8 = arith.muli %7, %c1024_i32 : i32
    %c512_i32 = arith.constant 512 : i32
    %9 = arith.cmpi sgt, %8, %c512_i32 : i32
    %10 = arith.extui %9 : i1 to i32
    %c0_i32_5 = arith.constant 0 : i32
    %11 = arith.cmpi ne, %10, %c0_i32_5 : i32
    scf.if %11 {
      %c1024_i32_9 = arith.constant 1024 : i32
      %18 = arith.muli %6, %c1024_i32_9 : i32
      %19 = tpu.iota {dimensions = array<i32: 0>} : vector<8x128xi32>
      %20 = tpu.iota {dimensions = array<i32: 1>} : vector<8x128xi32>
      %c128_i32 = arith.constant 128 : i32
      %21 = vector.broadcast %c128_i32 : i32 to vector<8x128xi32>
      %22 = arith.muli %19, %21 : vector<8x128xi32>
      %23 = vector.broadcast %18 : i32 to vector<8x128xi32>
      %24 = arith.addi %23, %22 : vector<8x128xi32>
      %25 = arith.addi %24, %20 : vector<8x128xi32>
      %c512_i32_10 = arith.constant 512 : i32
      %26 = vector.broadcast %c512_i32_10 : i32 to vector<8x128xi32>
      %27 = arith.cmpi slt, %25, %26 : vector<8x128xi32>
      %cst = arith.constant 0.000000e+00 : f32
      %28 = vector.broadcast %cst : f32 to vector<8x128xf32>
      %29 = arith.select %27, %3, %28 : vector<8x128xi1>, vector<8x128xf32>
      %cst_11 = arith.constant 0.000000e+00 : f32
      %30 = vector.broadcast %cst_11 : f32 to vector<8x128xf32>
      %31 = arith.select %27, %4, %30 : vector<8x128xi1>, vector<8x128xf32>
      %c0_12 = arith.constant 0 : index
      %c0_13 = arith.constant 0 : index
      %c0_14 = arith.constant 0 : index
      %32 = vector.load %arg5[%c0_12, %c0_13, %c0_14] : memref<2x8x128xf32, #tpu.memory_space<vmem>>, vector<1x8x128xf32>
      %33 = vector.shape_cast %32 : vector<1x8x128xf32> to vector<8x128xf32>
      %34 = arith.mulf %29, %31 : vector<8x128xf32>
      %35 = vector.shape_cast %34 : vector<8x128xf32> to vector<1x8x128xf32>
      %cst_15 = arith.constant dense<0.000000e+00> : vector<8x128xf32>
      %36 = vector.multi_reduction <add>, %35, %cst_15 [0] : vector<1x8x128xf32> to vector<8x128xf32>
      %37 = arith.addf %33, %36 : vector<8x128xf32>
      %c0_16 = arith.constant 0 : index
      %c0_17 = arith.constant 0 : index
      %c0_18 = arith.constant 0 : index
      %38 = vector.load %arg5[%c0_16, %c0_17, %c0_18] : memref<2x8x128xf32, #tpu.memory_space<vmem>>, vector<1x8x128xf32>
      %39 = vector.shape_cast %38 : vector<1x8x128xf32> to vector<8x128xf32>
      %40 = vector.shape_cast %37 : vector<8x128xf32> to vector<1x8x128xf32>
      tpu.vector_store %arg5[%c0_16, %c0_17, %c0_18], %40 {strides = array<i32>} : memref<2x8x128xf32, #tpu.memory_space<vmem>>, vector<1x8x128xf32>,
      %c1 = arith.constant 1 : index
      %c0_19 = arith.constant 0 : index
      %c0_20 = arith.constant 0 : index
      %41 = vector.load %arg5[%c1, %c0_19, %c0_20] : memref<2x8x128xf32, #tpu.memory_space<vmem>>, vector<1x8x128xf32>
      %42 = vector.shape_cast %41 : vector<1x8x128xf32> to vector<8x128xf32>
      %43 = arith.addf %29, %31 : vector<8x128xf32>
      %44 = vector.shape_cast %43 : vector<8x128xf32> to vector<1x8x128xf32>
      %cst_21 = arith.constant dense<0.000000e+00> : vector<8x128xf32>
      %45 = vector.multi_reduction <add>, %44, %cst_21 [0] : vector<1x8x128xf32> to vector<8x128xf32>
      %46 = arith.addf %42, %45 : vector<8x128xf32>
      %c1_22 = arith.constant 1 : index
      %c0_23 = arith.constant 0 : index
      %c0_24 = arith.constant 0 : index
      %47 = vector.load %arg5[%c1_22, %c0_23, %c0_24] : memref<2x8x128xf32, #tpu.memory_space<vmem>>, vector<1x8x128xf32>
      %48 = vector.shape_cast %47 : vector<1x8x128xf32> to vector<8x128xf32>
      %49 = vector.shape_cast %46 : vector<8x128xf32> to vector<1x8x128xf32>
      tpu.vector_store %arg5[%c1_22, %c0_23, %c0_24], %49 {strides = array<i32>} : memref<2x8x128xf32, #tpu.memory_space<vmem>>, vector<1x8x128xf32>,
    } else {
    }
    %true = arith.constant true
    %12 = arith.xori %9, %true : i1
    %13 = arith.extui %12 : i1 to i32
    %c0_i32_6 = arith.constant 0 : i32
    %14 = arith.cmpi ne, %13, %c0_i32_6 : i32
    scf.if %14 {
      %c0_9 = arith.constant 0 : index
      %c0_10 = arith.constant 0 : index
      %c0_11 = arith.constant 0 : index
      %18 = vector.load %arg5[%c0_9, %c0_10, %c0_11] : memref<2x8x128xf32, #tpu.memory_space<vmem>>, vector<1x8x128xf32>
      %19 = vector.shape_cast %18 : vector<1x8x128xf32> to vector<8x128xf32>
      %20 = arith.mulf %3, %4 : vector<8x128xf32>
      %21 = vector.shape_cast %20 : vector<8x128xf32> to vector<1x8x128xf32>
      %cst = arith.constant dense<0.000000e+00> : vector<8x128xf32>
      %22 = vector.multi_reduction <add>, %21, %cst [0] : vector<1x8x128xf32> to vector<8x128xf32>
      %23 = arith.addf %19, %22 : vector<8x128xf32>
      %c0_12 = arith.constant 0 : index
      %c0_13 = arith.constant 0 : index
      %c0_14 = arith.constant 0 : index
      %24 = vector.load %arg5[%c0_12, %c0_13, %c0_14] : memref<2x8x128xf32, #tpu.memory_space<vmem>>, vector<1x8x128xf32>
      %25 = vector.shape_cast %24 : vector<1x8x128xf32> to vector<8x128xf32>
      %26 = vector.shape_cast %23 : vector<8x128xf32> to vector<1x8x128xf32>
      tpu.vector_store %arg5[%c0_12, %c0_13, %c0_14], %26 {strides = array<i32>} : memref<2x8x128xf32, #tpu.memory_space<vmem>>, vector<1x8x128xf32>,
      %c1 = arith.constant 1 : index
      %c0_15 = arith.constant 0 : index
      %c0_16 = arith.constant 0 : index
      %27 = vector.load %arg5[%c1, %c0_15, %c0_16] : memref<2x8x128xf32, #tpu.memory_space<vmem>>, vector<1x8x128xf32>
      %28 = vector.shape_cast %27 : vector<1x8x128xf32> to vector<8x128xf32>
      %29 = arith.addf %3, %4 : vector<8x128xf32>
      %30 = vector.shape_cast %29 : vector<8x128xf32> to vector<1x8x128xf32>
      %cst_17 = arith.constant dense<0.000000e+00> : vector<8x128xf32>
      %31 = vector.multi_reduction <add>, %30, %cst_17 [0] : vector<1x8x128xf32> to vector<8x128xf32>
      %32 = arith.addf %28, %31 : vector<8x128xf32>
      %c1_18 = arith.constant 1 : index
      %c0_19 = arith.constant 0 : index
      %c0_20 = arith.constant 0 : index
      %33 = vector.load %arg5[%c1_18, %c0_19, %c0_20] : memref<2x8x128xf32, #tpu.memory_space<vmem>>, vector<1x8x128xf32>
      %34 = vector.shape_cast %33 : vector<1x8x128xf32> to vector<8x128xf32>
      %35 = vector.shape_cast %32 : vector<8x128xf32> to vector<1x8x128xf32>
      tpu.vector_store %arg5[%c1_18, %c0_19, %c0_20], %35 {strides = array<i32>} : memref<2x8x128xf32, #tpu.memory_space<vmem>>, vector<1x8x128xf32>,
    } else {
    }
    %c0_i32_7 = arith.constant 0 : i32
    %15 = arith.cmpi eq, %arg1, %c0_i32_7 : i32
    %16 = arith.extui %15 : i1 to i32
    %c0_i32_8 = arith.constant 0 : i32
    %17 = arith.cmpi ne, %16, %c0_i32_8 : i32
    scf.if %17 {
      %c0_9 = arith.constant 0 : index
      %c0_10 = arith.constant 0 : index
      %c0_11 = arith.constant 0 : index
      %18 = vector.load %arg5[%c0_9, %c0_10, %c0_11] : memref<2x8x128xf32, #tpu.memory_space<vmem>>, vector<2x8x128xf32>
      %c0_12 = arith.constant 0 : index
      %c0_13 = arith.constant 0 : index
      %c0_14 = arith.constant 0 : index
      %c0_15 = arith.constant 0 : index
      %19 = vector.load %arg4[%c0_12, %c0_13, %c0_14, %c0_15] : memref<1x2x8x128xf32, #tpu.memory_space<vmem>>, vector<1x2x8x128xf32>
      %20 = vector.shape_cast %19 : vector<1x2x8x128xf32> to vector<2x8x128xf32>
      %21 = vector.shape_cast %18 : vector<2x8x128xf32> to vector<1x2x8x128xf32>
      tpu.vector_store %arg4[%c0_12, %c0_13, %c0_14, %c0_15], %21 {strides = array<i32>} : memref<1x2x8x128xf32, #tpu.memory_space<vmem>>, vector<1x2x8x128xf32>,
    } else {
    }
    return
  }
  func.func @transform_0(%arg0: i32, %arg1: i32) -> (i32, i32) {
    %c1_i32 = arith.constant 1 : i32
    %0 = arith.muli %arg0, %c1_i32 : i32
    %1 = arith.addi %0, %arg1 : i32
    %c0_i32 = arith.constant 0 : i32
    %2 = arith.minsi %1, %c0_i32 : i32
    %c0_i32_0 = arith.constant 0 : i32
    %c0_i32_1 = arith.constant 0 : i32
    return %2, %c0_i32_0 : i32, i32
  }
  func.func @transform_1(%arg0: i32, %arg1: i32) -> (i32, i32) {
    %c1_i32 = arith.constant 1 : i32
    %0 = arith.muli %arg0, %c1_i32 : i32
    %1 = arith.addi %0, %arg1 : i32
    %c0_i32 = arith.constant 0 : i32
    %2 = arith.minsi %1, %c0_i32 : i32
    %c0_i32_0 = arith.constant 0 : i32
    %c0_i32_1 = arith.constant 0 : i32
    return %2, %c0_i32_0 : i32, i32
  }
  func.func @transform_2(%arg0: i32, %arg1: i32) -> (i32, i32, i32, i32) {
    %c0_i32 = arith.constant 0 : i32
    %c0_i32_0 = arith.constant 0 : i32
    %c0_i32_1 = arith.constant 0 : i32
    %c0_i32_2 = arith.constant 0 : i32
    return %arg0, %c0_i32, %c0_i32_0, %c0_i32_1 : i32, i32, i32, i32
  }
}

</mosaic_0001>

<llo_original>
// kernel: tpu_custom_call.1
$region0: #{tpu_custom_call.1}
  #allocation0 [shape = 'u32[]', space=smem, size = 0x4, offset = 0x4, fixed_abs, tag = 'smem constant byte address 0x4 - core index']
  #allocation1 [shape = 'u32[72,128]{1,0:T(1,128)}', space=vmem, size = 0x9000, scoped, tag = 'internal scratch']
  #allocation2 [shape = 'f32[2,8,128]{2,1,0:T(8,128)}', space=vmem, size = 0x2000, scoped, tag = 'scratch operand']
  %s0 = inlined_call_operand.hbm [shape: f32[8,128], index: 0, kind: input, shape index: {}]
  %s1 = inlined_call_operand.hbm [shape: f32[8,128], index: 1, kind: input, shape index: {}]
  %s2 = inlined_call_operand.hbm [shape: f32[2,2,8,128], index: 2, kind: output, shape index: {}]
  %s3 = sld [smem:[#allocation0]]
  $region65: #{tpu_custom_call.1} parent=0
    _
  %s5 = ssub.s32 1, %s3
  %s6 = scalar_select 0, %s5, %s3
  $region1: #{tpu_custom_call.1} parent=0
    #allocation3 [shape = 'u8[8192]{0}', space=vmem, size = 0x2000, scoped, tag = 'input window, operand 0']
    #allocation4 [shape = 's32[2]{0}', space=sflag, size = 0x8, scoped, tag = 'scoped memory for tpu_custom_call.1']
    #allocation5 [shape = 's32[2]{0}', space=sflag, size = 0x8, scoped, tag = 'scoped memory for tpu_custom_call.1']
    #allocation6 [shape = 'u8[8192]{0}', space=vmem, size = 0x2000, scoped, tag = 'input window, operand 1']
    #allocation7 [shape = 's32[2]{0}', space=sflag, size = 0x8, scoped, tag = 'scoped memory for tpu_custom_call.1']
    #allocation8 [shape = 'u8[16384]{0}', space=vmem, size = 0x4000, scoped, tag = 'output window, operand 0']
    %7 = vsyncpa [#allocation4], 0
    %s8 = scalar_lea.sflag [#allocation4], 1
    %9 = vsyncpa %s8, 0
    %10 = vsyncpa [#allocation7], 0
    %s11 = scalar_lea.sflag [#allocation7], 1
    %12 = vsyncpa %s11, 0
    %13 = vsyncpa [#allocation5], 0
    %s14 = scalar_lea.sflag [#allocation5], 1
    %15 = vsyncpa %s14, 0
    loop: start=0, step=1, limit=4
    $region2: #{tpu_custom_call.1} parent=1 // loop_pre_header
      _
    $region3: #{tpu_custom_call.1} parent=1 // loop_header
      %s17 = sphi 0, %s21
      %p18 = scmp.ge.s32.totalorder %s17, 4
      %s24 = sphi 0, %s36
      %s25 = sphi 0, %s32
      %s26 = sphi 0, %s24
      %s27 = sphi 0, %s25
      %s28 = sphi 0, %s26
      %s29 = sphi 0, %s27
      %s45 = sphi 0, %s47
      %s48 = sphi 0, %s45
      %s49 = sphi 0, %s48
      %s65 = sphi 0, %s49
      %s77 = sphi 0, %s79
      %s80 = sphi 0, %s77
      %s81 = sphi 0, %s80
      %s97 = sphi 0, %s81
      %s103 = sphi 0, %s105
      %s106 = sphi 0, %s103
      %s107 = sphi 0, %s106
      %s123 = sphi 0, %s107
    $region4: #{tpu_custom_call.1} parent=1 // loop_header_branch
      %20 = sbr.rel (%p18) target = $region8
    $region5: #{tpu_custom_call.1} parent=1 // loop_body
      %s22 = ssub.s32 %s17, 1
      %s23 = ssub.s32 %s17, 2
      %s30 = sadd.s32 1, %s25
      %p31 = scmp.ge.s32.totalorder %s30, 1
      %s32 = scalar_select %p31, 0, %s30
      %s33 = sadd.s32 1, %s24
      %s34 = scalar_select %p31, %s33, %s24
      %p35 = scmp.ge.s32.totalorder %s34, 2
      %s36 = scalar_select %p35, 0, %s34
      %s37 = sadd.s32 %s24, %s25
      %p38 = scmp.lt.s32.totalorder %s37, 0
      %s39 = scalar_select %p38, %s37, 0
      %s40 = sadd.s32 %s36, %s32
      %p41 = scmp.lt.s32.totalorder %s40, 0
      %s42 = scalar_select %p41, %s40, 0
      %s43 = ssub.s32 %s39, %s42
      %p44 = scmp.eq.s32.totalorder %s43, 0
      %s46 = sadd.s32 %s45, 1
      %s47 = scalar_select %p44, %s45, %s46
      %p50 = pneg %p44
      %p51 = scmp.eq.s32.totalorder %s17, 1
      %p52 = por %p50, %p51
      %p53 = scmp.ne.s32.totalorder %s45, %s48
      %p54 = scmp.eq.s32.totalorder %s17, 0
      %p55 = por %p53, %p54
      %p56 = scmp.ne.s32.totalorder %s45, %s48
      %p57 = scmp.eq.s32.totalorder %s22, 1
      %p58 = por %p56, %p57
      %p59 = scmp.ne.s32.totalorder %s48, %s49
      %p60 = scmp.eq.s32.totalorder %s22, 0
      %p61 = por %p59, %p60
      %p62 = scmp.ne.s32.totalorder %s48, %s49
      %p63 = scmp.eq.s32.totalorder %s23, 1
      %p64 = por %p62, %p63
      %p66 = scmp.ne.s32.totalorder %s49, %s65
      %p67 = scmp.eq.s32.totalorder %s23, 0
      %p68 = por %p66, %p67
      %s69 = sadd.s32 %s24, %s25
      %p70 = scmp.lt.s32.totalorder %s69, 0
      %s71 = scalar_select %p70, %s69, 0
      %s72 = sadd.s32 %s36, %s32
      %p73 = scmp.lt.s32.totalorder %s72, 0
      %s74 = scalar_select %p73, %s72, 0
      %s75 = ssub.s32 %s71, %s74
      %p76 = scmp.eq.s32.totalorder %s75, 0
      %s78 = sadd.s32 %s77, 1
      %s79 = scalar_select %p76, %s77, %s78
      %p82 = pneg %p76
      %p83 = scmp.eq.s32.totalorder %s17, 1
      %p84 = por %p82, %p83
      %p85 = scmp.ne.s32.totalorder %s77, %s80
      %p86 = scmp.eq.s32.totalorder %s17, 0
      %p87 = por %p85, %p86
      %p88 = scmp.ne.s32.totalorder %s77, %s80
      %p89 = scmp.eq.s32.totalorder %s22, 1
      %p90 = por %p88, %p89
      %p91 = scmp.ne.s32.totalorder %s80, %s81
      %p92 = scmp.eq.s32.totalorder %s22, 0
      %p93 = por %p91, %p92
      %p94 = scmp.ne.s32.totalorder %s80, %s81
      %p95 = scmp.eq.s32.totalorder %s23, 1
      %p96 = por %p94, %p95
      %p98 = scmp.ne.s32.totalorder %s81, %s97
      %p99 = scmp.eq.s32.totalorder %s23, 0
      %p100 = por %p98, %p99
      %s101 = ssub.s32 %s24, %s36
      %p102 = scmp.eq.s32.totalorder %s101, 0
      %s104 = sadd.s32 %s103, 1
      %s105 = scalar_select %p102, %s103, %s104
      %p108 = pneg %p102
      %p109 = scmp.eq.s32.totalorder %s17, 1
      %p110 = por %p108, %p109
      %p111 = scmp.ne.s32.totalorder %s103, %s106
      %p112 = scmp.eq.s32.totalorder %s17, 0
      %p113 = por %p111, %p112
      %p114 = scmp.ne.s32.totalorder %s103, %s106
      %p115 = scmp.eq.s32.totalorder %s22, 1
      %p116 = por %p114, %p115
      %p117 = scmp.ne.s32.totalorder %s106, %s107
      %p118 = scmp.eq.s32.totalorder %s22, 0
      %p119 = por %p117, %p118
      %p120 = scmp.ne.s32.totalorder %s106, %s107
      %p121 = scmp.eq.s32.totalorder %s23, 1
      %p122 = por %p120, %p121
      %p124 = scmp.ne.s32.totalorder %s107, %s123
      %p125 = scmp.eq.s32.totalorder %s23, 0
      %p126 = por %p124, %p125
      %p127 = scmp.le.s32.totalorder 1, %s17
      %p128 = scmp.lt.s32.totalorder %s17, 3
      %p129 = pnand %p127, %p128
      %p130 = pneg %p129
      // Predicated region
      $region9: #{tpu_custom_call.1} parent=5 // pred_check
        _
      $region10: #{tpu_custom_call.1} parent=5 // pred_check_branch
        %132 = sbr.rel (%p129) target = $region12
      $region11: #{tpu_custom_call.1} parent=5 // pred_region
        %s133 = ssub.s32 %s17, 1
      $region12: #{tpu_custom_call.1} parent=5 // pred_fallthru
        _
      %p134 = scmp.lt.s32.totalorder %s17, 2
      // Predicated region
      $region13: #{tpu_custom_call.1} parent=5 // pred_check
        %p135 = pneg %p134
      $region14: #{tpu_custom_call.1} parent=5 // pred_check_branch
        %137 = sbr.rel (%p135) target = $region16
      $region15: #{tpu_custom_call.1} parent=5 // pred_region
        // Predicated region
        $region17: #{tpu_custom_call.1} parent=15 // pred_check
          %p138 = pneg %p55
        $region18: #{tpu_custom_call.1} parent=15 // pred_check_branch
          %140 = sbr.rel (%p138) target = $region20
        $region19: #{tpu_custom_call.1} parent=15 // pred_region
          %s141 = sand.u32 %s45, 1
          %s142 = scalar_lea.sflag [#allocation4], %s141
          %s143 = sand.u32 %s45, 1
          %s144 = smul.addr %s143, 8
          %s145 = scalar_lea.vmem [#allocation3], %s144
          %s146 = sadd.s32 %s24, %s25
          %p147 = scmp.lt.s32.totalorder %s146, 0
          %s148 = scalar_select %p147, %s146, 0
          %150 = vsyncadd %s142, 0
          %s151 = smul.addr %s148, 8
          %s152 = scalar_lea.hbm %s0, %s151
          %s154 = sshll.u32 %s152, 4
          %s155 = int_to_ptr.hbm [resolvable:$true] %s154
          %s156 = sshll.u32 %s145, 4
          %s157 = int_to_ptr.vmem [resolvable:$true] %s156
          %159 = dma.hbm_to_vmem [thread:$0]  %s155, 128, %s157, %s142
        $region20: #{tpu_custom_call.1} parent=15 // pred_fallthru
          _
        // Predicated region
        $region21: #{tpu_custom_call.1} parent=15 // pred_check
          %p160 = pneg %p87
        $region22: #{tpu_custom_call.1} parent=15 // pred_check_branch
          %162 = sbr.rel (%p160) target = $region24
        $region23: #{tpu_custom_call.1} parent=15 // pred_region
          %s163 = sand.u32 %s77, 1
          %s164 = scalar_lea.sflag [#allocation7], %s163
          %s165 = sand.u32 %s77, 1
          %s166 = smul.addr %s165, 8
          %s167 = scalar_lea.vmem [#allocation6], %s166
          %s168 = sadd.s32 %s24, %s25
          %p169 = scmp.lt.s32.totalorder %s168, 0
          %s170 = scalar_select %p169, %s168, 0
          %172 = vsyncadd %s164, 0
          %s173 = smul.addr %s170, 8
          %s174 = scalar_lea.hbm %s1, %s173
          %s176 = sshll.u32 %s174, 4
          %s177 = int_to_ptr.hbm [resolvable:$true] %s176
          %s178 = sshll.u32 %s167, 4
          %s179 = int_to_ptr.vmem [resolvable:$true] %s178
          %181 = dma.hbm_to_vmem [thread:$0]  %s177, 128, %s179, %s164
        $region24: #{tpu_custom_call.1} parent=15 // pred_fallthru
          _
      $region16: #{tpu_custom_call.1} parent=5 // pred_fallthru
        _
      %p182 = scmp.le.s32.totalorder 1, %s17
      %p183 = scmp.lt.s32.totalorder %s17, 3
      %p184 = pnand %p182, %p183
      %p185 = pneg %p184
      // Predicated region
      $region25: #{tpu_custom_call.1} parent=5 // pred_check
        _
      $region26: #{tpu_custom_call.1} parent=5 // pred_check_branch
        %187 = sbr.rel (%p184) target = $region28
      $region27: #{tpu_custom_call.1} parent=5 // pred_region
        %s188 = ssub.s32 %s17, 1
        %s189 = sand.u32 %s48, 1
        %s190 = scalar_lea.sflag [#allocation4], %s189
        %s191 = sand.u32 %s48, 1
        %s192 = smul.addr %s191, 8
        %s193 = scalar_lea.vmem [#allocation3], %s192
        // Predicated region
        $region29: #{tpu_custom_call.1} parent=27 // pred_check
          %p194 = pneg %p61
        $region30: #{tpu_custom_call.1} parent=27 // pred_check_branch
          %196 = sbr.rel (%p194) target = $region32
        $region31: #{tpu_custom_call.1} parent=27 // pred_region
          %198 = dma.done %s190, 128
        $region32: #{tpu_custom_call.1} parent=27 // pred_fallthru
          _
        %s199 = sand.u32 %s80, 1
        %s200 = scalar_lea.sflag [#allocation7], %s199
        %s201 = sand.u32 %s80, 1
        %s202 = smul.addr %s201, 8
        %s203 = scalar_lea.vmem [#allocation6], %s202
        // Predicated region
        $region33: #{tpu_custom_call.1} parent=27 // pred_check
          %p204 = pneg %p93
        $region34: #{tpu_custom_call.1} parent=27 // pred_check_branch
          %206 = sbr.rel (%p204) target = $region36
        $region35: #{tpu_custom_call.1} parent=27 // pred_region
          %208 = dma.done %s200, 128
        $region36: #{tpu_custom_call.1} parent=27 // pred_fallthru
          _
        %s209 = sand.u32 %s48, 1
        %s210 = scalar_lea.sflag [#allocation4], %s209
        %s211 = sand.u32 %s48, 1
        %s212 = smul.addr %s211, 8
        %s213 = scalar_lea.vmem [#allocation3], %s212
        %p214 = pneg %p61
        %p215 = pneg %p58
        %s216 = sand.u32 %s80, 1
        %s217 = scalar_lea.sflag [#allocation7], %s216
        %s218 = sand.u32 %s80, 1
        %s219 = smul.addr %s218, 8
        %s220 = scalar_lea.vmem [#allocation6], %s219
        %p221 = pneg %p93
        %p222 = pneg %p90
        %p223 = pneg %p119
        %p224 = pneg %p116
        %s225 = sand.u32 %s106, 1
        %s226 = scalar_lea.sflag [#allocation5], %s225
        %s227 = sand.u32 %s106, 1
        %s228 = smul.addr %s227, 16
        %s229 = scalar_lea.vmem [#allocation8], %s228
        %s230 = sadd.s32 %s26, %s27
        %p231 = scmp.lt.s32.totalorder %s230, 0
        %s232 = scalar_select %p231, %s230, 0
        %s233 = sadd.s32 %s26, %s27
        %p234 = scmp.lt.s32.totalorder %s233, 0
        %s235 = scalar_select %p234, %s233, 0
        %p236 = scmp.eq.s32.totalorder %s27, 0
        // Predicated region
        $region37: #{tpu_custom_call.1} parent=27 // pred_check
          %p237 = pneg %p236
        $region38: #{tpu_custom_call.1} parent=27 // pred_check_branch
          %239 = sbr.rel (%p237) target = $region40
        $region39: #{tpu_custom_call.1} parent=27 // pred_region
          %240 = vst [vmem:[#allocation2] sm:$0xff] 0.0
          %241 = vst [vmem:[#allocation2 + $0x8] sm:$0xff] 0.0
        $region40: #{tpu_custom_call.1} parent=27 // pred_fallthru
          _
        %v242 = vld [vmem:[%s193] sm:$0xff]
        %v243 = vld [vmem:[%s203] sm:$0xff]
        %s244 = sadd.s32 %s26, %s27
        %s245 = sadd.s32 %s244, 1
        %s246 = smul.u32 %s245, 1024
        %p247 = scmp.gt.s32.totalorder %s246, 512
        // Predicated region
        $region41: #{tpu_custom_call.1} parent=27 // pred_check
          %p248 = pneg %p247
        $region42: #{tpu_custom_call.1} parent=27 // pred_check_branch
          %250 = sbr.rel (%p248) target = $region44
        $region43: #{tpu_custom_call.1} parent=27 // pred_region
          %s251 = smul.u32 %s244, 1024
          %v252 = vlaneseq
          %v253 = vshrl.u32 %v252, 7
          %v254 = vlaneseq
          %v255 = vand.u32 %v254, 127
          %v256 = vmul.u32 %v253, 128
          %v257 = vstv %s251
          %v258 = vadd.s32 %v257, %v256
          %v259 = vadd.s32 %v258, %v255
          %vm260 = vcmp.lt.s32.totalorder %v259, 512
          %v261 = vsel %vm260, %v242, 0.0
          %v262 = vsel %vm260, %v243, 0.0
          %v263 = vld [vmem:[#allocation2] sm:$0xff]
          %v264 = vmul.f32 %v261, %v262
          %v265 = vadd.f32 %v264, 0.0
          %v266 = vadd.f32 %v263, %v265
          %267 = vst [vmem:[#allocation2] sm:$0xff] %v266
          %s268 = scalar_lea.vmem [#allocation2], 8
          %v269 = vld [vmem:[%s268] sm:$0xff]
          %v270 = vadd.f32 %v261, %v262
          %v271 = vadd.f32 %v270, 0.0
          %v272 = vadd.f32 %v269, %v271
          %273 = vst [vmem:[%s268] sm:$0xff] %v272
        $region44: #{tpu_custom_call.1} parent=27 // pred_fallthru
          _
        %p274 = scmp.le.s32.totalorder %s246, 512
        // Predicated region
        $region45: #{tpu_custom_call.1} parent=27 // pred_check
          %p275 = pneg %p274
        $region46: #{tpu_custom_call.1} parent=27 // pred_check_branch
          %277 = sbr.rel (%p275) target = $region48
        $region47: #{tpu_custom_call.1} parent=27 // pred_region
          %v278 = vld [vmem:[#allocation2] sm:$0xff]
          %v279 = vmul.f32 %v242, %v243
          %v280 = vadd.f32 %v279, 0.0
          %v281 = vadd.f32 %v278, %v280
          %282 = vst [vmem:[#allocation2] sm:$0xff] %v281
          %s283 = scalar_lea.vmem [#allocation2], 8
          %v284 = vld [vmem:[%s283] sm:$0xff]
          %v285 = vadd.f32 %v242, %v243
          %v286 = vadd.f32 %v285, 0.0
          %v287 = vadd.f32 %v284, %v286
          %288 = vst [vmem:[%s283] sm:$0xff] %v287
        $region48: #{tpu_custom_call.1} parent=27 // pred_fallthru
          _
        // Predicated region
        $region49: #{tpu_custom_call.1} parent=27 // pred_check
          %p289 = pneg %p236
        $region50: #{tpu_custom_call.1} parent=27 // pred_check_branch
          %291 = sbr.rel (%p289) target = $region52
        $region51: #{tpu_custom_call.1} parent=27 // pred_region
          %v292 = vld [vmem:[#allocation2] sm:$0xff]
          %v293 = vld [vmem:[#allocation2 + $0x8] sm:$0xff]
          %294 = vst [vmem:[%s229] sm:$0xff] %v292
          %295 = vst [vmem:[%s229 + $0x8] sm:$0xff] %v293
        $region52: #{tpu_custom_call.1} parent=27 // pred_fallthru
          _
        %s296 = sand.u32 %s106, 1
        %s297 = scalar_lea.sflag [#allocation5], %s296
        %s298 = sand.u32 %s106, 1
        %s299 = smul.addr %s298, 16
        %s300 = scalar_lea.vmem [#allocation8], %s299
        // Predicated region
        $region53: #{tpu_custom_call.1} parent=27 // pred_check
          %p301 = pneg %p116
        $region54: #{tpu_custom_call.1} parent=27 // pred_check_branch
          %303 = sbr.rel (%p301) target = $region56
        $region55: #{tpu_custom_call.1} parent=27 // pred_region
          %305 = vsyncadd %s297, 0
          %s306 = smul.addr %s26, 2
          %s307 = smul.addr %s306, 8
          %s308 = scalar_lea.hbm %s2, %s307
          %s309 = sshll.u32 %s300, 4
          %s310 = int_to_ptr.vmem [resolvable:$true] %s309
          %s311 = sshll.u32 %s308, 4
          %s312 = int_to_ptr.hbm [resolvable:$true] %s311
          %317 = dma.vmem_to_hbm [thread:$0]  %s310, 256, %s312, %s297, 128, 128, 8
        $region56: #{tpu_custom_call.1} parent=27 // pred_fallthru
          _
      $region28: #{tpu_custom_call.1} parent=5 // pred_fallthru
        _
      %p318 = scmp.le.s32.totalorder 2, %s17
      // Predicated region
      $region57: #{tpu_custom_call.1} parent=5 // pred_check
        %p319 = pneg %p318
      $region58: #{tpu_custom_call.1} parent=5 // pred_check_branch
        %321 = sbr.rel (%p319) target = $region60
      $region59: #{tpu_custom_call.1} parent=5 // pred_region
        %s322 = ssub.s32 %s17, 2
        // Predicated region
        $region61: #{tpu_custom_call.1} parent=59 // pred_check
          %p323 = pneg %p122
        $region62: #{tpu_custom_call.1} parent=59 // pred_check_branch
          %325 = sbr.rel (%p323) target = $region64
        $region63: #{tpu_custom_call.1} parent=59 // pred_region
          %s326 = sand.u32 %s107, 1
          %s327 = scalar_lea.sflag [#allocation5], %s326
          %s328 = sand.u32 %s107, 1
          %s329 = smul.addr %s328, 16
          %s330 = scalar_lea.vmem [#allocation8], %s329
          %332 = dma.done %s327, 256
        $region64: #{tpu_custom_call.1} parent=59 // pred_fallthru
          _
      $region60: #{tpu_custom_call.1} parent=5 // pred_fallthru
        _
    $region6: #{tpu_custom_call.1} parent=1 // loop_footer
      %s21 = sadd.s32 1, %s17
    $region7: #{tpu_custom_call.1} parent=1 // loop_footer_branch
      %16 = sbr.rel target = $region3
    $region8: #{tpu_custom_call.1} parent=1 // loop_exit
      _
    %333 = vsyncpa [#allocation4], 1
    %s334 = scalar_lea.sflag [#allocation4], 1
    %335 = vsyncpa %s334, 1
    %336 = vsyncpa [#allocation7], 1
    %s337 = scalar_lea.sflag [#allocation7], 1
    %338 = vsyncpa %s337, 1
    %339 = vsyncpa [#allocation5], 1
    %s340 = scalar_lea.sflag [#allocation5], 1
    %341 = vsyncpa %s340, 1

</llo_original>
